<compile_context>
chip_gen: v7x
topology: tpu7x:2x2x1
jax: 0.10.0
libtpu: 0.0.40
codegen_flags: <defaults>
</compile_context>

<pallas_src>
import jax
import jax.numpy as jnp
from jax import lax
from jax.experimental import pallas as pl
from jax.experimental.pallas import tpu as pltpu

H = W = 28
HW = H * W           # 784 = fc input features (lane-dense contraction axis)
K = 3                # conv kernel size
OUT = 10             # number of classes
OUT_PAD = 128        # pad classes 10 -> 128 for full-lane, unmasked stores
TB_MAX = 2048        # max batch tile (multiple of 8); ~15 MiB double-buffered


def _round_up(x, m):
    return (x + m - 1) // m * m


def _cdiv(a, b):
    return (a + b - 1) // b


def fc_kernel(x_ref, w_ref, o_ref):
    """One batch tile: (TB, 784) @ (784, 128) on the MXU.

    x_ref : (TB, 784)      f32/bf16 VMEM  -- flattened input rows (batch tile)
    w_ref : (784, OUT_PAD) bf16 VMEM      -- conv-folded fc weight (resident)
    o_ref : (TB, OUT_PAD)  f32 VMEM

    The x tile is cast to bf16 in-kernel (cheap VPU op hidden under the DMA of
    the next tile); accumulation stays f32 via preferred_element_type.
    """
    x_bf16 = x_ref[...].astype(jnp.bfloat16)
    o_ref[...] = jnp.dot(x_bf16, w_ref[...],
                         preferred_element_type=jnp.float32)


def prepare_weights(w_conv, w_fc):
    """Fold Conv2d(1,1,3,stride=1,padding=1,bias=False) into Linear(784,10).

    Call ONCE per parameter set (not per forward): it launches a handful of
    tiny XLA ops that would otherwise rival the kernel at small batch sizes.

    y = W_fc @ flatten(C x)  ==>  y = flatten(x) @ W_eff with W_eff = C^T W_fc^T.
    C^T (transpose of a stride-1 symmetric 'SAME' cross-correlation) equals a
    cross-correlation with the spatially flipped kernel applied to each fc row
    viewed as 28x28.  Only valid for stride=1 / symmetric zero padding.

    Returns (784, OUT_PAD) bf16 with zero-padded extra output columns.
    """
    k_flip = w_conv[:, :, ::-1, ::-1].astype(jnp.float32)            # (1,1,3,3)
    w_img = w_fc.astype(jnp.float32).reshape(OUT, 1, H, W)           # (10,1,28,28)
    w_eff_img = lax.conv_general_dilated(
        w_img, k_flip, window_strides=(1, 1), padding=((1, 1), (1, 1)),
        dimension_numbers=("NCHW", "OIHW", "NCHW"))                  # (10,1,28,28)
    w_eff = w_eff_img.reshape(OUT, HW).T                             # (784, 10)
    w_eff = jnp.pad(w_eff, ((0, 0), (0, OUT_PAD - OUT)))             # (784, 128)
    return w_eff.astype(jnp.bfloat16)


def _pick_batch_tile(n):
    """Batch tile: multiple of 8, <= TB_MAX, and >= 2 grid steps when n > 8
    so the 'parallel' grid shards across both v7x TensorCores."""
    tb = _round_up(n, 8)
    if n > 8:
        tb = min(tb, _round_up(_cdiv(n, 2), 8))
    return min(TB_MAX, tb)


def cnn_forward(x_nchw, w_eff):
    """x_nchw: (N, 1, 28, 28) f32 or bf16; w_eff: (784, OUT_PAD) bf16 from
    prepare_weights().  Returns (N, 10) f32 logits."""
    n = x_nchw.shape[0]
    # Flatten matches PyTorch .view(-1, 784) (H-major, W-minor); contiguous,
    # so this reshape is free.  Keep the producer's dtype (f32 or bf16) -- no
    # wrapper-side cast (that would add a full extra HBM pass).
    x_flat = x_nchw.reshape(n, HW)
    if x_flat.dtype not in (jnp.float32, jnp.bfloat16):
        x_flat = x_flat.astype(jnp.float32)

    tb = _pick_batch_tile(n)
    grid = _cdiv(n, tb)   # last block may be partial: garbage rows only feed
                          # output rows >= n, sliced off below.

    out_padded = pl.pallas_call(
        fc_kernel,
        out_shape=jax.ShapeDtypeStruct((n, OUT_PAD), jnp.float32),
        grid=(grid,),
        in_specs=[
            pl.BlockSpec((tb, HW), lambda i: (i, 0)),        # batch tile of x
            # Resident weight (constant block index).  pipeline_mode=Buffered(1)
            # would save ~0.2 MiB but is skipped to keep lowering maximally safe.
            pl.BlockSpec((HW, OUT_PAD), lambda i: (0, 0)),
        ],
        out_specs=pl.BlockSpec((tb, OUT_PAD), lambda i: (i, 0)),
        compiler_params=pltpu.CompilerParams(
            dimension_semantics=("parallel",),    # megacore split on v7x
            vmem_limit_bytes=32 * 1024 * 1024),   # ~15-18 MiB needed at TB=2048
    )(x_flat, w_eff)

    return out_padded[:n, :OUT]


def reference_forward(x_nchw, w_conv, w_fc):
    """Pure-JAX f32 reference matching the PyTorch forward exactly (conv + fc)."""
    y = lax.conv_general_dilated(
        x_nchw.astype(jnp.float32), w_conv.astype(jnp.float32),
        window_strides=(1, 1), padding=((1, 1), (1, 1)),
        dimension_numbers=("NCHW", "OIHW", "NCHW"))
    flat = y.reshape(y.shape[0], -1)                                 # (N, 784)
    return flat @ w_fc.astype(jnp.float32).T                         # (N, 10)


if __name__ == "__main__":
    key = jax.random.PRNGKey(0)
    k_x, k_conv, k_fc = jax.random.split(key, 3)

    batch = 2
    x = jax.random.normal(k_x, (batch, 1, H, W), dtype=jnp.float32)
    # Deterministic synthetic parameters (shapes from CNN.__init__).
    w_conv = jax.random.normal(k_conv, (1, 1, K, K), dtype=jnp.float32) * 0.1
    w_fc = jax.random.normal(k_fc, (OUT, H * W), dtype=jnp.float32) * 0.05

    # Weight folding is hoisted out of the per-call path (done once).
    w_eff = jax.block_until_ready(prepare_weights(w_conv, w_fc))

    out = jax.block_until_ready(cnn_forward(x, w_eff))

    ref = jax.block_until_ready(reference_forward(x, w_conv, w_fc))
    assert out.shape == (batch, OUT)
    # bf16 matmul inputs carry ~3 significant digits; logits here are O(0.5).
    assert jnp.allclose(out, ref, atol=2e-2, rtol=2e-2), "mismatch vs reference"

    print("KERNEL_OK")
</pallas_src>

<mosaic_0001>
module attributes {stable_mosaic.version = 11 : i64} {
  func.func @fc_kernel(%arg0: i32, %arg1: memref<8x784xf32, #tpu.memory_space<vmem>>, %arg2: memref<784x128xbf16, #tpu.memory_space<vmem>>, %arg3: memref<8x128xf32, #tpu.memory_space<vmem>>) attributes {dimension_semantics = [#tpu.dimension_semantics<parallel>], iteration_bounds = array<i64: 1>, scalar_prefetch = 0 : i64, scratch_operands = 0 : i64, tpu.core_type = #tpu.core_type<tc>, window_params = [{transform_indices = @transform_0, window_bounds = array<i64: 8, 784>}, {pipeline_mode = #tpu.pipeline_mode<synchronous>, transform_indices = @transform_1, window_bounds = array<i64: 784, 128>}, {transform_indices = @transform_2, window_bounds = array<i64: 8, 128>}]} {
    %c0 = arith.constant 0 : index
    %c0_0 = arith.constant 0 : index
    %0 = vector.load %arg1[%c0, %c0_0] : memref<8x784xf32, #tpu.memory_space<vmem>>, vector<8x784xf32>
    %1 = arith.truncf %0 : vector<8x784xf32> to vector<8x784xbf16>
    %c0_1 = arith.constant 0 : index
    %c0_2 = arith.constant 0 : index
    %2 = vector.load %arg2[%c0_1, %c0_2] : memref<784x128xbf16, #tpu.memory_space<vmem>>, vector<784x128xbf16>
    %cst = arith.constant dense<0.000000e+00> : vector<8x128xf32>
    %3 = tpu.matmul %1, %2, %cst {dimension_numbers = #tpu.dot_dimension_numbers<[1], [0], [0], [1], [0, 0, 1, 1], [], []>} : vector<8x784xbf16>, vector<784x128xbf16>, vector<8x128xf32> -> vector<8x128xf32>
    %c0_3 = arith.constant 0 : index
    %c0_4 = arith.constant 0 : index
    %4 = vector.load %arg3[%c0_3, %c0_4] : memref<8x128xf32, #tpu.memory_space<vmem>>, vector<8x128xf32>
    tpu.vector_store %arg3[%c0_3, %c0_4], %3 {strides = array<i32>} : memref<8x128xf32, #tpu.memory_space<vmem>>, vector<8x128xf32>,
    return
  }
  func.func @transform_0(%arg0: i32) -> (i32, i32) {
    %c0_i32 = arith.constant 0 : i32
    %c0_i32_0 = arith.constant 0 : i32
    return %arg0, %c0_i32 : i32, i32
  }
  func.func @transform_1(%arg0: i32) -> (i32, i32) {
    %c0_i32 = arith.constant 0 : i32
    %c0_i32_0 = arith.constant 0 : i32
    %c0_i32_1 = arith.constant 0 : i32
    return %c0_i32, %c0_i32_0 : i32, i32
  }
  func.func @transform_2(%arg0: i32) -> (i32, i32) {
    %c0_i32 = arith.constant 0 : i32
    %c0_i32_0 = arith.constant 0 : i32
    return %arg0, %c0_i32 : i32, i32
  }
}

</mosaic_0001>

<llo_original>
// kernel: tpu_custom_call.1
$region0: #{tpu_custom_call.1}
  #allocation0 [shape = 'u32[]', space=smem, size = 0x4, offset = 0x4, fixed_abs, tag = 'smem constant byte address 0x4 - core index']
  #allocation1 [shape = 'u32[144,128]{1,0:T(1,128)}', space=vmem, size = 0x12000, scoped, tag = 'internal scratch']
  %s0 = inlined_call_operand.hbm [shape: f32[2,784], index: 0, kind: input, shape index: {}]
  %s1 = inlined_call_operand.hbm [shape: bf16[784,128], index: 1, kind: input, shape index: {}]
  %s2 = inlined_call_operand.hbm [shape: f32[2,128], index: 2, kind: output, shape index: {}]
  %s3 = sld [smem:[#allocation0]]
  $region26: #{tpu_custom_call.1} parent=0
    _
  %s5 = ssub.s32 1, %s3
  %s6 = scalar_select 0, %s5, %s3
  $region1: #{tpu_custom_call.1} parent=0
    #allocation2 [shape = 'u8[28672]{0}', space=vmem, size = 0x7000, scoped, tag = 'input window, operand 0, single buffered']
    #allocation3 [shape = 's32[1]{0}', space=sflag, size = 0x4, scoped, tag = 'scoped memory for tpu_custom_call.1']
    #allocation4 [shape = 's32[1]{0}', space=sflag, size = 0x4, scoped, tag = 'scoped memory for tpu_custom_call.1']
    #allocation5 [shape = 'u8[200704]{0}', space=vmem, size = 0x31000, scoped, tag = 'input window, operand 1, single buffered']
    #allocation6 [shape = 's32[1]{0}', space=sflag, size = 0x4, scoped, tag = 'scoped memory for tpu_custom_call.1']
    #allocation7 [shape = 'u8[4096]{0}', space=vmem, size = 0x1000, scoped, tag = 'output window, operand 0, single buffered']
    %7 = vsyncpa [#allocation3], 0
    %8 = vsyncpa [#allocation6], 0
    %9 = vsyncpa [#allocation4], 0
    // Predicated region
    $region2: #{tpu_custom_call.1} parent=1 // pred_check
      _
    $region3: #{tpu_custom_call.1} parent=1 // pred_check_branch
      %11 = sbr.rel (0) target = $region5
    $region4: #{tpu_custom_call.1} parent=1 // pred_region
      %s13 = ssub.s32 896, 224
      %14 = vsyncadd [#allocation3], %s13
      %s15 = sshll.u32 [#allocation2], 4
      %s16 = int_to_ptr.vmem [resolvable:$true] %s15
      %21 = dma.hbm_to_vmem [thread:$0]  %s0, 224, %s16, [#allocation3], 224, 224, 14
    $region5: #{tpu_custom_call.1} parent=1 // pred_fallthru
      _
    // Predicated region
    $region6: #{tpu_custom_call.1} parent=1 // pred_check
      _
    $region7: #{tpu_custom_call.1} parent=1 // pred_check_branch
      %23 = sbr.rel (0) target = $region9
    $region8: #{tpu_custom_call.1} parent=1 // pred_region
      %s25 = ssub.s32 6272, 6272
      %26 = vsyncadd [#allocation6], %s25
      %s27 = sshll.u32 [#allocation5], 4
      %s28 = int_to_ptr.vmem [resolvable:$true] %s27
      %33 = dma.hbm_to_vmem [thread:$0]  %s1, 6272, %s28, [#allocation6], 64, 64, 4
    $region9: #{tpu_custom_call.1} parent=1 // pred_fallthru
      _
    // Predicated region
    $region10: #{tpu_custom_call.1} parent=1 // pred_check
      _
    $region11: #{tpu_custom_call.1} parent=1 // pred_check_branch
      %35 = sbr.rel (0) target = $region13
    $region12: #{tpu_custom_call.1} parent=1 // pred_region
      %36 = dma.done [#allocation3], 896
    $region13: #{tpu_custom_call.1} parent=1 // pred_fallthru
      _
    // Predicated region
    $region14: #{tpu_custom_call.1} parent=1 // pred_check
      _
    $region15: #{tpu_custom_call.1} parent=1 // pred_check_branch
      %38 = sbr.rel (0) target = $region17
    $region16: #{tpu_custom_call.1} parent=1 // pred_region
      %39 = dma.done [#allocation6], 6272
    $region17: #{tpu_custom_call.1} parent=1 // pred_fallthru
      _
    %v41 = vld [vmem:[#allocation2] sm:$0xff]
    %v42 = vld [vmem:[#allocation2 + $0x8] sm:$0x3f]
    %v43 = vld [vmem:[#allocation2 + $0xe] sm:$0xff]
    %v44 = vld [vmem:[#allocation2 + $0x16] sm:$0x3f]
    %v45 = vld [vmem:[#allocation2 + $0x1c] sm:$0xff]
    %v46 = vld [vmem:[#allocation2 + $0x24] sm:$0x3f]
    %v47 = vld [vmem:[#allocation2 + $0x2a] sm:$0xff]
    %v48 = vld [vmem:[#allocation2 + $0x32] sm:$0x3f]
    %v57 = vcombine.low %v41, %v43
    %v58 = vcombine.high %v41, %v43
    %v59 = vcombine.low %v45, %v47
    %v60 = vcombine.high %v45, %v47
    %v62 = vunpack.c.l.s4 1983009808
    %v63 = vunpack.c.0.s8 %v62
    %v64 = vlaneseq
    %v65 = vshrl.u32 %v64, 7
    %v66 = vsub.s32 %v63, %v65
    %v67 = vrot.slane %v57, %v66
    %v69 = vunpack.c.l.s4 1983009808
    %v70 = vunpack.c.0.s8 %v69
    %v71 = vlaneseq
    %v72 = vshrl.u32 %v71, 7
    %v73 = vsub.s32 %v70, %v72
    %v74 = vrot.slane %v58, %v73
    %v76 = vunpack.c.l.s4 1983009808
    %v77 = vunpack.c.0.s8 %v76
    %v78 = vlaneseq
    %v79 = vshrl.u32 %v78, 7
    %v80 = vsub.s32 %v77, %v79
    %v81 = vrot.slane %v59, %v80
    %v83 = vunpack.c.l.s4 1983009808
    %v84 = vunpack.c.0.s8 %v83
    %v85 = vlaneseq
    %v86 = vshrl.u32 %v85, 7
    %v87 = vsub.s32 %v84, %v86
    %v88 = vrot.slane %v60, %v87
    %v89 = vcombine.low %v67, %v81
    %v90 = vcombine.high %v67, %v81
    %v91 = vcombine.low %v74, %v88
    %v92 = vcombine.high %v74, %v88
    %v93 = vcombine.low %v42, %v44
    %v94 = vcombine.high %v42, %v44
    %v95 = vcombine.low %v46, %v48
    %v96 = vcombine.high %v46, %v48
    %v98 = vunpack.c.l.s4 1983009808
    %v99 = vunpack.c.0.s8 %v98
    %v100 = vlaneseq
    %v101 = vshrl.u32 %v100, 7
    %v102 = vsub.s32 %v99, %v101
    %v103 = vrot.slane %v93, %v102
    %v105 = vunpack.c.l.s4 1983009808
    %v106 = vunpack.c.0.s8 %v105
    %v107 = vlaneseq
    %v108 = vshrl.u32 %v107, 7
    %v109 = vsub.s32 %v106, %v108
    %v110 = vrot.slane %v94, %v109
    %v112 = vunpack.c.l.s4 1983009808
    %v113 = vunpack.c.0.s8 %v112
    %v114 = vlaneseq
    %v115 = vshrl.u32 %v114, 7
    %v116 = vsub.s32 %v113, %v115
    %v117 = vrot.slane %v95, %v116
    %v119 = vunpack.c.l.s4 1983009808
    %v120 = vunpack.c.0.s8 %v119
    %v121 = vlaneseq
    %v122 = vshrl.u32 %v121, 7
    %v123 = vsub.s32 %v120, %v122
    %v124 = vrot.slane %v96, %v123
    %v125 = vcombine.low %v103, %v117
    %v126 = vcombine.high %v103, %v117
    %v127 = vcombine.low %v110, %v124
    %v135 = vpack.c.bf16 %v89, %v89
    %v136 = vpack.c.bf16 %v90, %v90
    %v137 = vpack.c.bf16 %v91, %v91
    %v138 = vpack.c.bf16 %v92, %v92
    %v139 = vpack.c.bf16 %v125, %v125
    %v140 = vpack.c.bf16 %v126, %v126
    %v141 = vpack.c.bf16 %v127, %v127
    %v142 = vld [vmem:[#allocation5] sm:$0xf]
    %v143 = vld [vmem:[#allocation5 + $0x4] sm:$0xf]
    %v144 = vld [vmem:[#allocation5 + $0x8] sm:$0xf]
    %v145 = vld [vmem:[#allocation5 + $0xc] sm:$0xf]
    %v146 = vld [vmem:[#allocation5 + $0x10] sm:$0xf]
    %v147 = vld [vmem:[#allocation5 + $0x14] sm:$0xf]
    %v148 = vld [vmem:[#allocation5 + $0x18] sm:$0xf]
    %v149 = vld [vmem:[#allocation5 + $0x1c] sm:$0xf]
    %v150 = vld [vmem:[#allocation5 + $0x20] sm:$0xf]
    %v151 = vld [vmem:[#allocation5 + $0x24] sm:$0xf]
    %v152 = vld [vmem:[#allocation5 + $0x28] sm:$0xf]
    %v153 = vld [vmem:[#allocation5 + $0x2c] sm:$0xf]
    %v154 = vld [vmem:[#allocation5 + $0x30] sm:$0xf]
    %v155 = vld [vmem:[#allocation5 + $0x34] sm:$0xf]
    %v156 = vld [vmem:[#allocation5 + $0x38] sm:$0xf]
    %v157 = vld [vmem:[#allocation5 + $0x3c] sm:$0xf]
    %v158 = vld [vmem:[#allocation5 + $0x40] sm:$0xf]
    %v159 = vld [vmem:[#allocation5 + $0x44] sm:$0xf]
    %v160 = vld [vmem:[#allocation5 + $0x48] sm:$0xf]
    %v161 = vld [vmem:[#allocation5 + $0x4c] sm:$0xf]
    %v162 = vld [vmem:[#allocation5 + $0x50] sm:$0xf]
    %v163 = vld [vmem:[#allocation5 + $0x54] sm:$0xf]
    %v164 = vld [vmem:[#allocation5 + $0x58] sm:$0xf]
    %v165 = vld [vmem:[#allocation5 + $0x5c] sm:$0xf]
    %v166 = vld [vmem:[#allocation5 + $0x60] sm:$0xf]
    %v167 = vld [vmem:[#allocation5 + $0x64] sm:$0xf]
    %v168 = vld [vmem:[#allocation5 + $0x68] sm:$0xf]
    %v169 = vld [vmem:[#allocation5 + $0x6c] sm:$0xf]
    %v170 = vld [vmem:[#allocation5 + $0x70] sm:$0xf]
    %v171 = vld [vmem:[#allocation5 + $0x74] sm:$0xf]
    %v172 = vld [vmem:[#allocation5 + $0x78] sm:$0xf]
    %v173 = vld [vmem:[#allocation5 + $0x7c] sm:$0xf]
    %v174 = vld [vmem:[#allocation5 + $0x80] sm:$0xf]
    %v175 = vld [vmem:[#allocation5 + $0x84] sm:$0xf]
    %v176 = vld [vmem:[#allocation5 + $0x88] sm:$0xf]
    %v177 = vld [vmem:[#allocation5 + $0x8c] sm:$0xf]
    %v178 = vld [vmem:[#allocation5 + $0x90] sm:$0xf]
    %v179 = vld [vmem:[#allocation5 + $0x94] sm:$0xf]
    %v180 = vld [vmem:[#allocation5 + $0x98] sm:$0xf]
    %v181 = vld [vmem:[#allocation5 + $0x9c] sm:$0xf]
    %v182 = vld [vmem:[#allocation5 + $0xa0] sm:$0xf]
    %v183 = vld [vmem:[#allocation5 + $0xa4] sm:$0xf]
    %v184 = vld [vmem:[#allocation5 + $0xa8] sm:$0xf]
    %v185 = vld [vmem:[#allocation5 + $0xac] sm:$0xf]
    %v186 = vld [vmem:[#allocation5 + $0xb0] sm:$0xf]
    %v187 = vld [vmem:[#allocation5 + $0xb4] sm:$0xf]
    %v188 = vld [vmem:[#allocation5 + $0xb8] sm:$0xf]
    %v189 = vld [vmem:[#allocation5 + $0xbc] sm:$0xf]
    %v190 = vld [vmem:[#allocation5 + $0xc0] sm:$0xf]
    %v191 = vld [vmem:[#allocation5 + $0xc4] sm:$0xf]
    %v192 = vld [vmem:[#allocation5 + $0xc8] sm:$0xf]
    %v193 = vld [vmem:[#allocation5 + $0xcc] sm:$0xf]
    %v194 = vld [vmem:[#allocation5 + $0xd0] sm:$0xf]
    %v195 = vld [vmem:[#allocation5 + $0xd4] sm:$0xf]
    %v196 = vld [vmem:[#allocation5 + $0xd8] sm:$0xf]
    %v197 = vld [vmem:[#allocation5 + $0xdc] sm:$0xf]
    %v198 = vld [vmem:[#allocation5 + $0xe0] sm:$0xf]
    %v199 = vld [vmem:[#allocation5 + $0xe4] sm:$0xf]
    %v200 = vld [vmem:[#allocation5 + $0xe8] sm:$0xf]
    %v201 = vld [vmem:[#allocation5 + $0xec] sm:$0xf]
    %v202 = vld [vmem:[#allocation5 + $0xf0] sm:$0xf]
    %v203 = vld [vmem:[#allocation5 + $0xf4] sm:$0xf]
    %v204 = vld [vmem:[#allocation5 + $0xf8] sm:$0xf]
    %v205 = vld [vmem:[#allocation5 + $0xfc] sm:$0xf]
    %v206 = vld [vmem:[#allocation5 + $0x100] sm:$0xf]
    %v207 = vld [vmem:[#allocation5 + $0x104] sm:$0xf]
    %v208 = vld [vmem:[#allocation5 + $0x108] sm:$0xf]
    %v209 = vld [vmem:[#allocation5 + $0x10c] sm:$0xf]
    %v210 = vld [vmem:[#allocation5 + $0x110] sm:$0xf]
    %v211 = vld [vmem:[#allocation5 + $0x114] sm:$0xf]
    %v212 = vld [vmem:[#allocation5 + $0x118] sm:$0xf]
    %v213 = vld [vmem:[#allocation5 + $0x11c] sm:$0xf]
    %v214 = vld [vmem:[#allocation5 + $0x120] sm:$0xf]
    %v215 = vld [vmem:[#allocation5 + $0x124] sm:$0xf]
    %v216 = vld [vmem:[#allocation5 + $0x128] sm:$0xf]
    %v217 = vld [vmem:[#allocation5 + $0x12c] sm:$0xf]
    %v218 = vld [vmem:[#allocation5 + $0x130] sm:$0xf]
    %v219 = vld [vmem:[#allocation5 + $0x134] sm:$0xf]
    %v220 = vld [vmem:[#allocation5 + $0x138] sm:$0xf]
    %v221 = vld [vmem:[#allocation5 + $0x13c] sm:$0xf]
    %v222 = vld [vmem:[#allocation5 + $0x140] sm:$0xf]
    %v223 = vld [vmem:[#allocation5 + $0x144] sm:$0xf]
    %v224 = vld [vmem:[#allocation5 + $0x148] sm:$0xf]
    %v225 = vld [vmem:[#allocation5 + $0x14c] sm:$0xf]
    %v226 = vld [vmem:[#allocation5 + $0x150] sm:$0xf]
    %v227 = vld [vmem:[#allocation5 + $0x154] sm:$0xf]
    %v228 = vld [vmem:[#allocation5 + $0x158] sm:$0xf]
    %v229 = vld [vmem:[#allocation5 + $0x15c] sm:$0xf]
    %v230 = vld [vmem:[#allocation5 + $0x160] sm:$0xf]
    %v231 = vld [vmem:[#allocation5 + $0x164] sm:$0xf]
    %v232 = vld [vmem:[#allocation5 + $0x168] sm:$0xf]
    %v233 = vld [vmem:[#allocation5 + $0x16c] sm:$0xf]
    %v234 = vld [vmem:[#allocation5 + $0x170] sm:$0xf]
    %v235 = vld [vmem:[#allocation5 + $0x174] sm:$0xf]
    %v236 = vld [vmem:[#allocation5 + $0x178] sm:$0xf]
    %v237 = vld [vmem:[#allocation5 + $0x17c] sm:$0xf]
    %v238 = vld [vmem:[#allocation5 + $0x180] sm:$0xf]
    %v239 = vld [vmem:[#allocation5 + $0x184] sm:$0xf]
    %v338 = vunpack.c.l.b16 %v142
    %v339 = vunpack.c.l.b16 %v143
    %v340 = vunpack.c.l.b16 %v144
    %v341 = vunpack.c.l.b16 %v145
    %v342 = vunpack.c.l.b16 %v146
    %v343 = vunpack.c.l.b16 %v147
    %v344 = vunpack.c.l.b16 %v148
    %v345 = vunpack.c.l.b16 %v149
    %v346 = vunpack.c.l.b16 %v150
    %v347 = vunpack.c.l.b16 %v151
    %v348 = vunpack.c.l.b16 %v152
    %v349 = vunpack.c.l.b16 %v153
    %v350 = vunpack.c.l.b16 %v154
    %v351 = vunpack.c.l.b16 %v155
    %v352 = vunpack.c.l.b16 %v156
    %v353 = vunpack.c.l.b16 %v157
    %v354 = vunpack.c.l.b16 %v158
    %v355 = vunpack.c.l.b16 %v159
    %v356 = vunpack.c.l.b16 %v160
    %v357 = vunpack.c.l.b16 %v161
    %v358 = vunpack.c.l.b16 %v162
    %v359 = vunpack.c.l.b16 %v163
    %v360 = vunpack.c.l.b16 %v164
    %v361 = vunpack.c.l.b16 %v165
    %v362 = vunpack.c.l.b16 %v166
    %v363 = vunpack.c.l.b16 %v167
    %v364 = vunpack.c.l.b16 %v168
    %v365 = vunpack.c.l.b16 %v169
    %v366 = vunpack.c.l.b16 %v170
    %v367 = vunpack.c.l.b16 %v171
    %v368 = vunpack.c.l.b16 %v172
    %v369 = vunpack.c.l.b16 %v173
    %v370 = vunpack.c.l.b16 %v174
    %v371 = vunpack.c.l.b16 %v175
    %v372 = vunpack.c.l.b16 %v176
    %v373 = vunpack.c.l.b16 %v177
    %v374 = vunpack.c.l.b16 %v178
    %v375 = vunpack.c.l.b16 %v179
    %v376 = vunpack.c.l.b16 %v180
    %v377 = vunpack.c.l.b16 %v181
    %v378 = vunpack.c.l.b16 %v182
    %v379 = vunpack.c.l.b16 %v183
    %v380 = vunpack.c.l.b16 %v184
    %v381 = vunpack.c.l.b16 %v185
    %v382 = vunpack.c.l.b16 %v186
    %v383 = vunpack.c.l.b16 %v187
    %v384 = vunpack.c.l.b16 %v188
    %v385 = vunpack.c.l.b16 %v189
    %v386 = vunpack.c.l.b16 %v190
    %v387 = vunpack.c.l.b16 %v191
    %v388 = vunpack.c.l.b16 %v192
    %v389 = vunpack.c.l.b16 %v193
    %v390 = vunpack.c.l.b16 %v194
    %v391 = vunpack.c.l.b16 %v195
    %v392 = vunpack.c.l.b16 %v196
    %v393 = vunpack.c.l.b16 %v197
    %v394 = vunpack.c.l.b16 %v198
    %v395 = vunpack.c.l.b16 %v199
    %v396 = vunpack.c.l.b16 %v200
    %v397 = vunpack.c.l.b16 %v201
    %v398 = vunpack.c.l.b16 %v202
    %v399 = vunpack.c.l.b16 %v203
    %v400 = vunpack.c.l.b16 %v204
    %v401 = vunpack.c.l.b16 %v205
    %v402 = vunpack.c.l.b16 %v206
    %v403 = vunpack.c.l.b16 %v207
    %v404 = vunpack.c.l.b16 %v208
    %v405 = vunpack.c.l.b16 %v209
    %v406 = vunpack.c.l.b16 %v210
    %v407 = vunpack.c.l.b16 %v211
    %v408 = vunpack.c.l.b16 %v212
    %v409 = vunpack.c.l.b16 %v213
    %v410 = vunpack.c.l.b16 %v214
    %v411 = vunpack.c.l.b16 %v215
    %v412 = vunpack.c.l.b16 %v216
    %v413 = vunpack.c.l.b16 %v217
    %v414 = vunpack.c.l.b16 %v218
    %v415 = vunpack.c.l.b16 %v219
    %v416 = vunpack.c.l.b16 %v220
    %v417 = vunpack.c.l.b16 %v221
    %v418 = vunpack.c.l.b16 %v222
    %v419 = vunpack.c.l.b16 %v223
    %v420 = vunpack.c.l.b16 %v224
    %v421 = vunpack.c.l.b16 %v225
    %v422 = vunpack.c.l.b16 %v226
    %v423 = vunpack.c.l.b16 %v227
    %v424 = vunpack.c.l.b16 %v228
    %v425 = vunpack.c.l.b16 %v229
    %v426 = vunpack.c.l.b16 %v230
    %v427 = vunpack.c.l.b16 %v231
    %v428 = vunpack.c.l.b16 %v232
    %v429 = vunpack.c.l.b16 %v233
    %v430 = vunpack.c.l.b16 %v234
    %v431 = vunpack.c.l.b16 %v235
    %v432 = vunpack.c.l.b16 %v236
    %v433 = vunpack.c.l.b16 %v237
    %v434 = vunpack.c.l.b16 %v238
    %v435 = vunpack.c.l.b16 %v239
    %v436 = vpack.c.b16 %v339, %v338
    %v437 = vpack.c.b16 %v341, %v340
    %v438 = vpack.c.b16 %v343, %v342
    %v439 = vpack.c.b16 %v345, %v344
    %v440 = vpack.c.b16 %v347, %v346
    %v441 = vpack.c.b16 %v349, %v348
    %v442 = vpack.c.b16 %v351, %v350
    %v443 = vpack.c.b16 %v353, %v352
    %v444 = vpack.c.b16 %v355, %v354
    %v445 = vpack.c.b16 %v357, %v356
    %v446 = vpack.c.b16 %v359, %v358
    %v447 = vpack.c.b16 %v361, %v360
    %v448 = vpack.c.b16 %v363, %v362
    %v449 = vpack.c.b16 %v365, %v364
    %v450 = vpack.c.b16 %v367, %v366
    %v451 = vpack.c.b16 %v369, %v368
    %v452 = vpack.c.b16 %v371, %v370
    %v453 = vpack.c.b16 %v373, %v372
    %v454 = vpack.c.b16 %v375, %v374
    %v455 = vpack.c.b16 %v377, %v376
    %v456 = vpack.c.b16 %v379, %v378
    %v457 = vpack.c.b16 %v381, %v380
    %v458 = vpack.c.b16 %v383, %v382
    %v459 = vpack.c.b16 %v385, %v384
    %v460 = vpack.c.b16 %v387, %v386
    %v461 = vpack.c.b16 %v389, %v388
    %v462 = vpack.c.b16 %v391, %v390
    %v463 = vpack.c.b16 %v393, %v392
    %v464 = vpack.c.b16 %v395, %v394
    %v465 = vpack.c.b16 %v397, %v396
    %v466 = vpack.c.b16 %v399, %v398
    %v467 = vpack.c.b16 %v401, %v400
    %v468 = vpack.c.b16 %v403, %v402
    %v469 = vpack.c.b16 %v405, %v404
    %v470 = vpack.c.b16 %v407, %v406
    %v471 = vpack.c.b16 %v409, %v408
    %v472 = vpack.c.b16 %v411, %v410
    %v473 = vpack.c.b16 %v413, %v412
    %v474 = vpack.c.b16 %v415, %v414
    %v475 = vpack.c.b16 %v417, %v416
    %v476 = vpack.c.b16 %v419, %v418
    %v477 = vpack.c.b16 %v421, %v420
    %v478 = vpack.c.b16 %v423, %v422
    %v479 = vpack.c.b16 %v425, %v424
    %v480 = vpack.c.b16 %v427, %v426
    %v481 = vpack.c.b16 %v429, %v428
    %v482 = vpack.c.b16 %v431, %v430
    %v483 = vpack.c.b16 %v433, %v432
    %v484 = vpack.c.b16 %v435, %v434
    %vm534 = vcmask 130048
    %v536 = vsel %vm534, %v141, 0
    %538 = vmatprep.subr.bf16.mxu0 0
    %539 = vmatpush1.bf16.msra.mxu0 %v436
    %540 = vmatprep.subr.bf16.mxu0 0
    %541 = vmatpush1.bf16.msra.mxu0 %v437
    %542 = vmatprep.subr.bf16.mxu0 0
    %543 = vmatpush1.bf16.msra.mxu0 %v438
    %544 = vmatprep.subr.bf16.mxu0 0
    %545 = vmatpush1.bf16.msra.mxu0 %v439
    %546 = vmatprep.subr.bf16.mxu0 0
    %547 = vmatpush1.bf16.msra.mxu0 %v440
    %548 = vmatprep.subr.bf16.mxu0 0
    %549 = vmatpush1.bf16.msra.mxu0 %v441
    %550 = vmatprep.subr.bf16.mxu0 0
    %551 = vmatpush1.bf16.msra.mxu0 %v442
    %552 = vmatprep.subr.bf16.mxu0 0
    %553 = vmatpush1.bf16.msra.mxu0 %v443
    %554 = vmatprep.subr.bf16.mxu0 0
    %555 = vmatpush1.bf16.msra.mxu0 %v444
    %556 = vmatprep.subr.bf16.mxu0 0
    %557 = vmatpush1.bf16.msra.mxu0 %v445
    %558 = vmatprep.subr.bf16.mxu0 0
    %559 = vmatpush1.bf16.msra.mxu0 %v446
    %560 = vmatprep.subr.bf16.mxu0 0
    %561 = vmatpush1.bf16.msra.mxu0 %v447
    %562 = vmatprep.subr.bf16.mxu0 0
    %563 = vmatpush1.bf16.msra.mxu0 %v448
    %564 = vmatprep.subr.bf16.mxu0 0
    %565 = vmatpush1.bf16.msra.mxu0 %v449
    %566 = vmatprep.subr.bf16.mxu0 0
    %567 = vmatpush1.bf16.msra.mxu0 %v450
    %568 = vmatprep.subr.bf16.mxu0 0
    %569 = vmatpush1.bf16.msra.mxu0 %v451
    %570 = vmatprep.mubr.bf16.mxu0 %v136
    %571 = vmatmul.mubr.bf16.gmra.mrb[0].mxu0 %v135
    %v572 = vpop.f32.mrb[0].mxu0
    %v573 = vadd.f32 0.0, %v572
    %v574 = vpop.f32.mrb[0].mxu0
    %v575 = vpop.f32.mrb[0].mxu0
    %v576 = vpop.f32.mrb[0].mxu0
    %577 = vdwg.mxu0
    %578 = vmatprep.subr.bf16.mxu0 0
    %579 = vmatpush1.bf16.msra.mxu0 %v452
    %580 = vmatprep.subr.bf16.mxu0 0
    %581 = vmatpush1.bf16.msra.mxu0 %v453
    %582 = vmatprep.subr.bf16.mxu0 0
    %583 = vmatpush1.bf16.msra.mxu0 %v454
    %584 = vmatprep.subr.bf16.mxu0 0
    %585 = vmatpush1.bf16.msra.mxu0 %v455
    %586 = vmatprep.subr.bf16.mxu0 0
    %587 = vmatpush1.bf16.msra.mxu0 %v456
    %588 = vmatprep.subr.bf16.mxu0 0
    %589 = vmatpush1.bf16.msra.mxu0 %v457
    %590 = vmatprep.subr.bf16.mxu0 0
    %591 = vmatpush1.bf16.msra.mxu0 %v458
    %592 = vmatprep.subr.bf16.mxu0 0
    %593 = vmatpush1.bf16.msra.mxu0 %v459
    %594 = vmatprep.subr.bf16.mxu0 0
    %595 = vmatpush1.bf16.msra.mxu0 %v460
    %596 = vmatprep.subr.bf16.mxu0 0
    %597 = vmatpush1.bf16.msra.mxu0 %v461
    %598 = vmatprep.subr.bf16.mxu0 0
    %599 = vmatpush1.bf16.msra.mxu0 %v462
    %600 = vmatprep.subr.bf16.mxu0 0
    %601 = vmatpush1.bf16.msra.mxu0 %v463
    %602 = vmatprep.subr.bf16.mxu0 0
    %603 = vmatpush1.bf16.msra.mxu0 %v464
    %604 = vmatprep.subr.bf16.mxu0 0
    %605 = vmatpush1.bf16.msra.mxu0 %v465
    %606 = vmatprep.subr.bf16.mxu0 0
    %607 = vmatpush1.bf16.msra.mxu0 %v466
    %608 = vmatprep.subr.bf16.mxu0 0
    %609 = vmatpush1.bf16.msra.mxu0 %v467
    %610 = vmatprep.mubr.bf16.mxu0 %v138
    %611 = vmatmul.mubr.bf16.gmra.mrb[0].mxu0 %v137
    %v612 = vpop.f32.mrb[0].mxu0
    %v613 = vadd.f32 %v573, %v612
    %v614 = vpop.f32.mrb[0].mxu0
    %v615 = vpop.f32.mrb[0].mxu0
    %v616 = vpop.f32.mrb[0].mxu0
    %617 = vdwg.mxu0
    %618 = vmatprep.subr.bf16.mxu0 0
    %619 = vmatpush1.bf16.msra.mxu0 %v468
    %620 = vmatprep.subr.bf16.mxu0 0
    %621 = vmatpush1.bf16.msra.mxu0 %v469
    %622 = vmatprep.subr.bf16.mxu0 0
    %623 = vmatpush1.bf16.msra.mxu0 %v470
    %624 = vmatprep.subr.bf16.mxu0 0
    %625 = vmatpush1.bf16.msra.mxu0 %v471
    %626 = vmatprep.subr.bf16.mxu0 0
    %627 = vmatpush1.bf16.msra.mxu0 %v472
    %628 = vmatprep.subr.bf16.mxu0 0
    %629 = vmatpush1.bf16.msra.mxu0 %v473
    %630 = vmatprep.subr.bf16.mxu0 0
    %631 = vmatpush1.bf16.msra.mxu0 %v474
    %632 = vmatprep.subr.bf16.mxu0 0
    %633 = vmatpush1.bf16.msra.mxu0 %v475
    %634 = vmatprep.subr.bf16.mxu0 0
    %635 = vmatpush1.bf16.msra.mxu0 %v476
    %636 = vmatprep.subr.bf16.mxu0 0
    %637 = vmatpush1.bf16.msra.mxu0 %v477
    %638 = vmatprep.subr.bf16.mxu0 0
    %639 = vmatpush1.bf16.msra.mxu0 %v478
    %640 = vmatprep.subr.bf16.mxu0 0
    %641 = vmatpush1.bf16.msra.mxu0 %v479
    %642 = vmatprep.subr.bf16.mxu0 0
    %643 = vmatpush1.bf16.msra.mxu0 %v480
    %644 = vmatprep.subr.bf16.mxu0 0
    %645 = vmatpush1.bf16.msra.mxu0 %v481
    %646 = vmatprep.subr.bf16.mxu0 0
    %647 = vmatpush1.bf16.msra.mxu0 %v482
    %648 = vmatprep.subr.bf16.mxu0 0
    %649 = vmatpush1.bf16.msra.mxu0 %v483
    %650 = vmatprep.mubr.bf16.mxu0 %v140
    %651 = vmatmul.mubr.bf16.gmra.mrb[0].mxu0 %v139
    %v652 = vpop.f32.mrb[0].mxu0
    %v653 = vadd.f32 %v613, %v652
    %v654 = vpop.f32.mrb[0].mxu0
    %v655 = vpop.f32.mrb[0].mxu0
    %v656 = vpop.f32.mrb[0].mxu0
    %657 = vdwg.mxu0
    %658 = vmatprep.subr.bf16.mxu0 0
    %659 = vmatpush1.bf16.msra.mxu0 %v484
    %660 = vmatprep.subr.bf16.mxu0 0
    %661 = vmatpush1.bf16.msra.mxu0 0
    %662 = vmatprep.subr.bf16.mxu0 0
    %663 = vmatpush1.bf16.msra.mxu0 0
    %664 = vmatprep.subr.bf16.mxu0 0
    %665 = vmatpush1.bf16.msra.mxu0 0
    %666 = vmatprep.subr.bf16.mxu0 0
    %667 = vmatpush1.bf16.msra.mxu0 0
    %668 = vmatprep.subr.bf16.mxu0 0
    %669 = vmatpush1.bf16.msra.mxu0 0
    %670 = vmatprep.subr.bf16.mxu0 0
    %671 = vmatpush1.bf16.msra.mxu0 0
    %672 = vmatprep.subr.bf16.mxu0 0
    %673 = vmatpush1.bf16.msra.mxu0 0
    %674 = vmatprep.subr.bf16.mxu0 0
    %675 = vmatpush1.bf16.msra.mxu0 0
    %676 = vmatprep.subr.bf16.mxu0 0
    %677 = vmatpush1.bf16.msra.mxu0 0
    %678 = vmatprep.subr.bf16.mxu0 0
    %679 = vmatpush1.bf16.msra.mxu0 0
    %680 = vmatprep.subr.bf16.mxu0 0
    %681 = vmatpush1.bf16.msra.mxu0 0
    %682 = vmatprep.subr.bf16.mxu0 0
    %683 = vmatpush1.bf16.msra.mxu0 0
    %684 = vmatprep.subr.bf16.mxu0 0
    %685 = vmatpush1.bf16.msra.mxu0 0
    %686 = vmatprep.subr.bf16.mxu0 0
    %687 = vmatpush1.bf16.msra.mxu0 0
    %688 = vmatprep.subr.bf16.mxu0 0
    %689 = vmatpush1.bf16.msra.mxu0 0
    %690 = vmatprep.mubr.bf16.mxu0 0
    %691 = vmatmul.mubr.bf16.gmra.mrb[0].mxu0 %v536
    %v692 = vpop.f32.mrb[0].mxu0
    %v693 = vadd.f32 %v653, %v692
    %v694 = vpop.f32.mrb[0].mxu0
    %v695 = vpop.f32.mrb[0].mxu0
    %v696 = vpop.f32.mrb[0].mxu0
    %697 = vdwg.mxu0
    %698 = vst [vmem:[#allocation7] sm:$0xff] %v693
    // Predicated region
    $region18: #{tpu_custom_call.1} parent=1 // pred_check
      _
    $region19: #{tpu_custom_call.1} parent=1 // pred_check_branch
      %700 = sbr.rel (0) target = $region21
    $region20: #{tpu_custom_call.1} parent=1 // pred_region
      %s702 = ssub.s32 128, 32
      %703 = vsyncadd [#allocation4], %s702
      %s704 = sshll.u32 [#allocation7], 4
      %s705 = int_to_ptr.vmem [resolvable:$true] %s704
      %710 = dma.vmem_to_hbm [thread:$0]  %s705, 32, %s2, [#allocation4], 32, 32, 2
    $region21: #{tpu_custom_call.1} parent=1 // pred_fallthru
      _
    // Predicated region
    $region22: #{tpu_custom_call.1} parent=1 // pred_check
      _
    $region23: #{tpu_custom_call.1} parent=1 // pred_check_branch
      %712 = sbr.rel (0) target = $region25
    $region24: #{tpu_custom_call.1} parent=1 // pred_region
      %713 = dma.done [#allocation4], 128
    $region25: #{tpu_custom_call.1} parent=1 // pred_fallthru
      _
    %714 = vsyncpa [#allocation3], 1
    %715 = vsyncpa [#allocation6], 1
    %716 = vsyncpa [#allocation4], 1

</llo_original>
